<compile_context>
chip_gen: v7x
topology: tpu7x:2x2x1
jax: 0.10.0
libtpu: 0.0.40
codegen_flags: <defaults>
</compile_context>

<pallas_src>
import functools

import jax
import jax.numpy as jnp
from jax.experimental import pallas as pl
from jax.experimental.pallas import tpu as pltpu


def _round_up(x, m):
    return (x + m - 1) // m * m


def _vocab_tiling(vocab, max_tile=2048):
    """Lane-dense vocab tiling: one tile if it fits, else 2048-wide tiles."""
    v128 = _round_up(vocab, 128)
    if v128 <= max_tile:
        return v128, v128
    return max_tile, _round_up(vocab, max_tile)


# ---------------------------------------------------------------------------
# Fused kernel: hidden projections -> logits -> online log-sum-exp -> in-place
# log_softmax, over a (batch tile, vocab tile) grid.  The output row-block stays
# resident in VMEM across the vocab axis.
# ---------------------------------------------------------------------------
def ngram_logsoftmax_kernel(ng_ref, py_ref, w1_ref, b1_ref, w2_ref, b2_ref,
                            w3_ref, b3_ref, out_ref, h_s, m_s, l_s, *, nvt):
    j = pl.program_id(1)
    tn = w3_ref.shape[1]

    @pl.when(j == 0)
    def _():
        # Hidden projections: computed once per batch tile, reused for every
        # vocab tile.  bf16 x bf16 -> f32 accumulation on the MXU.
        h1 = jnp.dot(ng_ref[...].astype(jnp.bfloat16), w1_ref[...],
                     preferred_element_type=jnp.float32) + b1_ref[...]
        h2 = jnp.dot(py_ref[...].astype(jnp.bfloat16), w2_ref[...],
                     preferred_element_type=jnp.float32) + b2_ref[...]
        h_s[:, :128] = h1
        h_s[:, 128:] = h2
        m_s[...] = jnp.full(m_s.shape, -jnp.inf, dtype=m_s.dtype)
        l_s[...] = jnp.zeros(l_s.shape, dtype=l_s.dtype)

    # Fused third linear: one K=256 contraction (no concat, no w3 split), bf16
    # operands, f32 accumulation.  Bias (f32) added after the MXU.
    logits = jnp.dot(h_s[...].astype(jnp.bfloat16), w3_ref[...],
                     preferred_element_type=jnp.float32) + b3_ref[...]

    # Write this vocab tile into the resident (TB, V_pad) output block.
    if nvt == 1:
        out_ref[...] = logits
    else:
        col0 = pl.multiple_of(j * tn, 128)
        out_ref[:, pl.ds(col0, tn)] = logits

    # Online log-sum-exp across vocab tiles (f32 epilogue).
    m_prev = m_s[...]
    m_new = jnp.maximum(m_prev, jnp.max(logits, axis=-1, keepdims=True))
    l_s[...] = (l_s[...] * jnp.exp(m_prev - m_new)
                + jnp.sum(jnp.exp(logits - m_new), axis=-1, keepdims=True))
    m_s[...] = m_new

    @pl.when(j == nvt - 1)
    def _():
        # log_softmax in place on the resident output block before writeback.
        out_ref[...] = out_ref[...] - (m_s[...] + jnp.log(l_s[...]))


# ---------------------------------------------------------------------------
# One-time parameter prep (nn.Linear init; weights pre-transposed, padded to the
# kernel's tiling, stored in bf16; biases f32, pre-reshaped / pre-padded).
# ---------------------------------------------------------------------------
def init_params(key, ngram_fea_len, pinyin_fea_len, vocb_size):
    ks = jax.random.split(key, 6)

    def lin(kw, kb, fan_in, fan_out):
        bound = 1.0 / jnp.sqrt(float(fan_in))
        w_t = jax.random.uniform(kw, (fan_in, fan_out), jnp.float32, -bound, bound)
        b = jax.random.uniform(kb, (fan_out,), jnp.float32, -bound, bound)
        return w_t, b

    w1_t, b1 = lin(ks[0], ks[1], ngram_fea_len, 128)
    w2_t, b2 = lin(ks[2], ks[3], pinyin_fea_len, 128)
    w3_t, b3 = lin(ks[4], ks[5], 256, vocb_size)

    n1p = _round_up(ngram_fea_len, 128)
    n2p = _round_up(pinyin_fea_len, 128)
    tn, v_pad = _vocab_tiling(vocb_size)

    # Zero-padded feature rows leave the matmul unchanged; padded vocab columns
    # get a hugely negative bias so exp() underflows to 0 in the online LSE.
    w1_p = jnp.pad(w1_t, ((0, n1p - ngram_fea_len), (0, 0))).astype(jnp.bfloat16)
    w2_p = jnp.pad(w2_t, ((0, n2p - pinyin_fea_len), (0, 0))).astype(jnp.bfloat16)
    w3_p = jnp.pad(w3_t, ((0, 0), (0, v_pad - vocb_size))).astype(jnp.bfloat16)
    b3_p = jnp.pad(b3, (0, v_pad - vocb_size), constant_values=-1e30).reshape(1, -1)

    return {
        "w1": w1_p, "b1": b1.reshape(1, -1),
        "w2": w2_p, "b2": b2.reshape(1, -1),
        "w3": w3_p, "b3": b3_p,
        "n1": ngram_fea_len, "n2": pinyin_fea_len, "vocab": vocb_size,
    }


# ---------------------------------------------------------------------------
# Forward wrapper.  1-D inputs reproduce the PyTorch module exactly ((1, vocab)
# output); 2-D (B, fea_len) inputs are the natural batched extension.
# ---------------------------------------------------------------------------
def ngram_forward(ngram_feat, pinyin_feat, params):
    w1, b1, w2, b2, w3, b3 = (params["w1"], params["b1"], params["w2"],
                              params["b2"], params["w3"], params["b3"])
    vocab = params["vocab"]
    n1, n2 = params["n1"], params["n2"]
    n1p, n2p = w1.shape[0], w2.shape[0]
    v_pad = w3.shape[1]
    tn, v_pad_chk = _vocab_tiling(vocab)
    assert v_pad == v_pad_chk

    ng = jnp.atleast_2d(jnp.asarray(ngram_feat, jnp.float32))
    py = jnp.atleast_2d(jnp.asarray(pinyin_feat, jnp.float32))
    assert ng.shape[1] == n1 and py.shape[1] == n2
    B = ng.shape[0]

    # Per-generation VMEM budget (v7x: 64 MiB/TC; v5e/v6e: 128 MiB).
    try:
        vmem_cap = int(pltpu.get_tpu_info().vmem_capacity_bytes)
    except Exception:
        vmem_cap = 64 * 1024 * 1024  # conservative fallback
    vmem_limit = min(vmem_cap // 2, 64 * 1024 * 1024)

    # Batch tiling: pad to a sublane multiple; prefer >= 2 batch blocks when the
    # batch allows so both v7x TensorCores get work on the "parallel" axis.
    B_pad = max(8, _round_up(B, 8))
    TB = min(B_pad, 128)
    if B_pad >= 16 and B_pad // TB < 2:
        TB = max(8, _round_up(B_pad // 2, 8))

    # Shrink TB so resident output block + buffered weights fit the VMEM budget.
    def _vmem_need(tb):
        out_b = 2 * tb * v_pad * 4                     # double-buffered resident out
        w3_b = 3 * (256 * tn * 2 + tn * 4)             # w3 (bf16) + b3 (f32), 3 bufs
        io_b = 2 * tb * (n1p + n2p) * 4                # input feature tiles
        wsm_b = 2 * ((n1p + n2p) * 128 * 2 + 2 * 128 * 4)
        scr_b = tb * 256 * 4 + 2 * tb * 4
        return out_b + w3_b + io_b + wsm_b + scr_b

    while TB > 8 and _vmem_need(TB) > int(0.8 * vmem_limit):
        TB = max(8, _round_up(TB // 2, 8))
    # TODO(synk): for vocabularies so large that even TB=8 overflows the budget,
    # fall back to a two-pass (logits+lse, then normalize) pipeline instead of the
    # resident-output epilogue.
    B_pad = _round_up(B_pad, TB)

    ng = jnp.pad(ng, ((0, B_pad - B), (0, n1p - n1)))
    py = jnp.pad(py, ((0, B_pad - B), (0, n2p - n2)))

    nb, nvt = B_pad // TB, v_pad // tn
    grid = (nb, nvt)

    # Deeper pipelining of the dominant w3/b3 stream when there are enough vocab
    # tiles for it to matter (hides DMA issue latency at small TB).
    if nvt > 2:
        w3_spec = pl.BlockSpec((256, tn), lambda i, j: (0, j),
                               pipeline_mode=pl.Buffered(3))
        b3_spec = pl.BlockSpec((1, tn), lambda i, j: (0, j),
                               pipeline_mode=pl.Buffered(3))
    else:
        w3_spec = pl.BlockSpec((256, tn), lambda i, j: (0, j))
        b3_spec = pl.BlockSpec((1, tn), lambda i, j: (0, j))

    log_prob = pl.pallas_call(
        functools.partial(ngram_logsoftmax_kernel, nvt=nvt),
        out_shape=jax.ShapeDtypeStruct((B_pad, v_pad), jnp.float32),
        grid_spec=pltpu.PrefetchScalarGridSpec(
            num_scalar_prefetch=0,
            grid=grid,
            in_specs=[
                pl.BlockSpec((TB, n1p), lambda i, j: (i, 0)),   # ngram feats (f32)
                pl.BlockSpec((TB, n2p), lambda i, j: (i, 0)),   # pinyin feats (f32)
                pl.BlockSpec((n1p, 128), lambda i, j: (0, 0)),  # w1 (bf16)
                pl.BlockSpec((1, 128), lambda i, j: (0, 0)),    # b1 (f32)
                pl.BlockSpec((n2p, 128), lambda i, j: (0, 0)),  # w2 (bf16)
                pl.BlockSpec((1, 128), lambda i, j: (0, 0)),    # b2 (f32)
                w3_spec,                                        # w3 fused (256,TN) bf16
                b3_spec,                                        # b3 (f32, -1e30 pad)
            ],
            # Output row-block resident across the vocab ("arbitrary") axis.
            out_specs=pl.BlockSpec((TB, v_pad), lambda i, j: (i, 0)),
            scratch_shapes=[
                pltpu.VMEM((TB, 256), jnp.float32),  # fused hidden vector h
                pltpu.VMEM((TB, 1), jnp.float32),    # running max
                pltpu.VMEM((TB, 1), jnp.float32),    # running sum-exp
            ],
        ),
        compiler_params=pltpu.CompilerParams(
            dimension_semantics=("parallel", "arbitrary"),
            vmem_limit_bytes=vmem_limit,
        ),
    )(ng, py, w1, b1, w2, b2, w3, b3)

    # Strip batch / vocab padding. For 1-D inputs this is (1, vocab) == unsqueeze(0).
    return log_prob[:B, :vocab]


# ---------------------------------------------------------------------------
# Pure-JAX reference mirroring the kernel's numerics (bf16 operands, f32 acc).
# ---------------------------------------------------------------------------
def reference_forward(ngram_feat, pinyin_feat, params):
    vocab = params["vocab"]
    ng = jnp.atleast_2d(jnp.asarray(ngram_feat, jnp.float32)).astype(jnp.bfloat16)
    py = jnp.atleast_2d(jnp.asarray(pinyin_feat, jnp.float32)).astype(jnp.bfloat16)
    w1 = params["w1"][:ng.shape[1]]
    w2 = params["w2"][:py.shape[1]]
    h1 = jnp.dot(ng, w1, preferred_element_type=jnp.float32) + params["b1"]
    h2 = jnp.dot(py, w2, preferred_element_type=jnp.float32) + params["b2"]
    h = jnp.concatenate([h1, h2], axis=-1).astype(jnp.bfloat16)
    logits = (jnp.dot(h, params["w3"], preferred_element_type=jnp.float32)
              + params["b3"])[:, :vocab]
    return jax.nn.log_softmax(logits, axis=-1)


if __name__ == "__main__":
    ngram_fea_len = 32
    pinyin_fea_len = 16
    vocb_size = 256

    key = jax.random.PRNGKey(0)
    k_ng, k_py, k_params, k_bng, k_bpy = jax.random.split(key, 5)
    params = init_params(k_params, ngram_fea_len, pinyin_fea_len, vocb_size)

    # --- single-sample case: exactly the PyTorch module's forward -> (1, vocab) ---
    ngram_feat = jax.random.normal(k_ng, (ngram_fea_len,), jnp.float32)
    pinyin_feat = jax.random.normal(k_py, (pinyin_fea_len,), jnp.float32)
    out = jax.block_until_ready(ngram_forward(ngram_feat, pinyin_feat, params))
    ref = reference_forward(ngram_feat, pinyin_feat, params)
    assert out.shape == (1, vocb_size), out.shape
    assert jnp.allclose(out, ref, atol=2e-3, rtol=2e-3), (
        "single-sample mismatch, max abs err = %g"
        % float(jnp.max(jnp.abs(out - ref))))

    # --- batched case (B=16 -> two batch blocks on the 'parallel' axis) ---
    B = 16
    ng_b = jax.random.normal(k_bng, (B, ngram_fea_len), jnp.float32)
    py_b = jax.random.normal(k_bpy, (B, pinyin_fea_len), jnp.float32)
    out_b = jax.block_until_ready(ngram_forward(ng_b, py_b, params))
    ref_b = reference_forward(ng_b, py_b, params)
    assert out_b.shape == (B, vocb_size), out_b.shape
    assert jnp.allclose(out_b, ref_b, atol=2e-3, rtol=2e-3), (
        "batched mismatch, max abs err = %g"
        % float(jnp.max(jnp.abs(out_b - ref_b))))

    print("KERNEL_OK")
</pallas_src>

<mosaic_0001>
module attributes {stable_mosaic.version = 11 : i64} {
  func.func @ngram_logsoftmax_kernel(%arg0: i32, %arg1: i32, %arg2: memref<8x128xf32, #tpu.memory_space<vmem>>, %arg3: memref<8x128xf32, #tpu.memory_space<vmem>>, %arg4: memref<128x128xbf16, #tpu.memory_space<vmem>>, %arg5: memref<1x128xf32, #tpu.memory_space<vmem>>, %arg6: memref<128x128xbf16, #tpu.memory_space<vmem>>, %arg7: memref<1x128xf32, #tpu.memory_space<vmem>>, %arg8: memref<256x256xbf16, #tpu.memory_space<vmem>>, %arg9: memref<1x256xf32, #tpu.memory_space<vmem>>, %arg10: memref<8x256xf32, #tpu.memory_space<vmem>>, %arg11: memref<8x256xf32, #tpu.memory_space<vmem>>, %arg12: memref<8x1xf32, #tpu.memory_space<vmem>>, %arg13: memref<8x1xf32, #tpu.memory_space<vmem>>) attributes {dimension_semantics = [#tpu.dimension_semantics<parallel>, #tpu.dimension_semantics<arbitrary>], iteration_bounds = array<i64: 1, 1>, scalar_prefetch = 0 : i64, scratch_operands = 3 : i64, tpu.core_type = #tpu.core_type<tc>, window_params = [{transform_indices = @transform_0, window_bounds = array<i64: 8, 128>}, {transform_indices = @transform_1, window_bounds = array<i64: 8, 128>}, {pipeline_mode = #tpu.pipeline_mode<synchronous>, transform_indices = @transform_2, window_bounds = array<i64: 128, 128>}, {pipeline_mode = #tpu.pipeline_mode<synchronous>, transform_indices = @transform_3, window_bounds = array<i64: 1, 128>}, {pipeline_mode = #tpu.pipeline_mode<synchronous>, transform_indices = @transform_4, window_bounds = array<i64: 128, 128>}, {pipeline_mode = #tpu.pipeline_mode<synchronous>, transform_indices = @transform_5, window_bounds = array<i64: 1, 128>}, {transform_indices = @transform_6, window_bounds = array<i64: 256, 256>}, {transform_indices = @transform_7, window_bounds = array<i64: 1, 256>}, {transform_indices = @transform_8, window_bounds = array<i64: 8, 256>}]} {
    %c0_i32 = arith.constant 0 : i32
    %0 = arith.cmpi eq, %arg1, %c0_i32 : i32
    %1 = arith.extui %0 : i1 to i32
    %c0_i32_0 = arith.constant 0 : i32
    %2 = arith.cmpi ne, %1, %c0_i32_0 : i32
    scf.if %2 {
      %c0_20 = arith.constant 0 : index
      %c0_21 = arith.constant 0 : index
      %30 = vector.load %arg2[%c0_20, %c0_21] : memref<8x128xf32, #tpu.memory_space<vmem>>, vector<8x128xf32>
      %31 = arith.truncf %30 : vector<8x128xf32> to vector<8x128xbf16>
      %c0_22 = arith.constant 0 : index
      %c0_23 = arith.constant 0 : index
      %32 = vector.load %arg4[%c0_22, %c0_23] : memref<128x128xbf16, #tpu.memory_space<vmem>>, vector<128x128xbf16>
      %cst_24 = arith.constant dense<0.000000e+00> : vector<8x128xf32>
      %33 = tpu.matmul %31, %32, %cst_24 {dimension_numbers = #tpu.dot_dimension_numbers<[1], [0], [0], [1], [0, 0, 1, 1], [], []>} : vector<8x128xbf16>, vector<128x128xbf16>, vector<8x128xf32> -> vector<8x128xf32>
      %c0_25 = arith.constant 0 : index
      %c0_26 = arith.constant 0 : index
      %34 = vector.load %arg5[%c0_25, %c0_26] : memref<1x128xf32, #tpu.memory_space<vmem>>, vector<1x128xf32>
      %35 = vector.broadcast %34 : vector<1x128xf32> to vector<8x128xf32>
      %36 = arith.addf %33, %35 : vector<8x128xf32>
      %c0_27 = arith.constant 0 : index
      %c0_28 = arith.constant 0 : index
      %37 = vector.load %arg3[%c0_27, %c0_28] : memref<8x128xf32, #tpu.memory_space<vmem>>, vector<8x128xf32>
      %38 = arith.truncf %37 : vector<8x128xf32> to vector<8x128xbf16>
      %c0_29 = arith.constant 0 : index
      %c0_30 = arith.constant 0 : index
      %39 = vector.load %arg6[%c0_29, %c0_30] : memref<128x128xbf16, #tpu.memory_space<vmem>>, vector<128x128xbf16>
      %cst_31 = arith.constant dense<0.000000e+00> : vector<8x128xf32>
      %40 = tpu.matmul %38, %39, %cst_31 {dimension_numbers = #tpu.dot_dimension_numbers<[1], [0], [0], [1], [0, 0, 1, 1], [], []>} : vector<8x128xbf16>, vector<128x128xbf16>, vector<8x128xf32> -> vector<8x128xf32>
      %c0_32 = arith.constant 0 : index
      %c0_33 = arith.constant 0 : index
      %41 = vector.load %arg7[%c0_32, %c0_33] : memref<1x128xf32, #tpu.memory_space<vmem>>, vector<1x128xf32>
      %42 = vector.broadcast %41 : vector<1x128xf32> to vector<8x128xf32>
      %43 = arith.addf %40, %42 : vector<8x128xf32>
      %c0_34 = arith.constant 0 : index
      %c0_35 = arith.constant 0 : index
      %44 = vector.load %arg11[%c0_34, %c0_35] : memref<8x256xf32, #tpu.memory_space<vmem>>, vector<8x128xf32>
      tpu.vector_store %arg11[%c0_34, %c0_35], %36 {strides = array<i32>} : memref<8x256xf32, #tpu.memory_space<vmem>>, vector<8x128xf32>,
      %c0_36 = arith.constant 0 : index
      %c128 = arith.constant 128 : index
      %45 = vector.load %arg11[%c0_36, %c128] : memref<8x256xf32, #tpu.memory_space<vmem>>, vector<8x128xf32>
      tpu.vector_store %arg11[%c0_36, %c128], %43 {strides = array<i32>} : memref<8x256xf32, #tpu.memory_space<vmem>>, vector<8x128xf32>,
      %cst_37 = arith.constant 0xFF800000 : f32
      %46 = vector.broadcast %cst_37 : f32 to vector<8x1xf32>
      %c0_38 = arith.constant 0 : index
      %c0_39 = arith.constant 0 : index
      %47 = vector.load %arg12[%c0_38, %c0_39] : memref<8x1xf32, #tpu.memory_space<vmem>>, vector<8x1xf32>
      tpu.vector_store %arg12[%c0_38, %c0_39], %46 {strides = array<i32>} : memref<8x1xf32, #tpu.memory_space<vmem>>, vector<8x1xf32>,
      %cst_40 = arith.constant 0.000000e+00 : f32
      %48 = vector.broadcast %cst_40 : f32 to vector<8x1xf32>
      %c0_41 = arith.constant 0 : index
      %c0_42 = arith.constant 0 : index
      %49 = vector.load %arg13[%c0_41, %c0_42] : memref<8x1xf32, #tpu.memory_space<vmem>>, vector<8x1xf32>
      tpu.vector_store %arg13[%c0_41, %c0_42], %48 {strides = array<i32>} : memref<8x1xf32, #tpu.memory_space<vmem>>, vector<8x1xf32>,
    } else {
    }
    %c0 = arith.constant 0 : index
    %c0_1 = arith.constant 0 : index
    %3 = vector.load %arg11[%c0, %c0_1] : memref<8x256xf32, #tpu.memory_space<vmem>>, vector<8x256xf32>
    %4 = arith.truncf %3 : vector<8x256xf32> to vector<8x256xbf16>
    %c0_2 = arith.constant 0 : index
    %c0_3 = arith.constant 0 : index
    %5 = vector.load %arg8[%c0_2, %c0_3] : memref<256x256xbf16, #tpu.memory_space<vmem>>, vector<256x256xbf16>
    %cst = arith.constant dense<0.000000e+00> : vector<8x256xf32>
    %6 = tpu.matmul %4, %5, %cst {dimension_numbers = #tpu.dot_dimension_numbers<[1], [0], [0], [1], [0, 0, 1, 1], [], []>} : vector<8x256xbf16>, vector<256x256xbf16>, vector<8x256xf32> -> vector<8x256xf32>
    %c0_4 = arith.constant 0 : index
    %c0_5 = arith.constant 0 : index
    %7 = vector.load %arg9[%c0_4, %c0_5] : memref<1x256xf32, #tpu.memory_space<vmem>>, vector<1x256xf32>
    %8 = vector.broadcast %7 : vector<1x256xf32> to vector<8x256xf32>
    %9 = arith.addf %6, %8 : vector<8x256xf32>
    %c0_6 = arith.constant 0 : index
    %c0_7 = arith.constant 0 : index
    %10 = vector.load %arg10[%c0_6, %c0_7] : memref<8x256xf32, #tpu.memory_space<vmem>>, vector<8x256xf32>
    tpu.vector_store %arg10[%c0_6, %c0_7], %9 {strides = array<i32>} : memref<8x256xf32, #tpu.memory_space<vmem>>, vector<8x256xf32>,
    %c0_8 = arith.constant 0 : index
    %c0_9 = arith.constant 0 : index
    %11 = vector.load %arg12[%c0_8, %c0_9] : memref<8x1xf32, #tpu.memory_space<vmem>>, vector<8x1xf32>
    %cst_10 = arith.constant dense<0xFF800000> : vector<8xf32>
    %12 = vector.multi_reduction <maximumf>, %9, %cst_10 [1] : vector<8x256xf32> to vector<8xf32>
    %13 = vector.shape_cast %12 : vector<8xf32> to vector<8x1xf32>
    %14 = arith.maximumf %11, %13 : vector<8x1xf32>
    %c0_11 = arith.constant 0 : index
    %c0_12 = arith.constant 0 : index
    %15 = vector.load %arg13[%c0_11, %c0_12] : memref<8x1xf32, #tpu.memory_space<vmem>>, vector<8x1xf32>
    %16 = arith.subf %11, %14 : vector<8x1xf32>
    %17 = math.exp %16 : vector<8x1xf32>
    %18 = arith.mulf %15, %17 : vector<8x1xf32>
    %19 = vector.broadcast %14 : vector<8x1xf32> to vector<8x256xf32>
    %20 = arith.subf %9, %19 : vector<8x256xf32>
    %21 = math.exp %20 : vector<8x256xf32>
    %cst_13 = arith.constant dense<0.000000e+00> : vector<8xf32>
    %22 = vector.multi_reduction <add>, %21, %cst_13 [1] : vector<8x256xf32> to vector<8xf32>
    %23 = vector.shape_cast %22 : vector<8xf32> to vector<8x1xf32>
    %24 = arith.addf %18, %23 : vector<8x1xf32>
    %c0_14 = arith.constant 0 : index
    %c0_15 = arith.constant 0 : index
    %25 = vector.load %arg13[%c0_14, %c0_15] : memref<8x1xf32, #tpu.memory_space<vmem>>, vector<8x1xf32>
    tpu.vector_store %arg13[%c0_14, %c0_15], %24 {strides = array<i32>} : memref<8x1xf32, #tpu.memory_space<vmem>>, vector<8x1xf32>,
    %c0_16 = arith.constant 0 : index
    %c0_17 = arith.constant 0 : index
    %26 = vector.load %arg12[%c0_16, %c0_17] : memref<8x1xf32, #tpu.memory_space<vmem>>, vector<8x1xf32>
    tpu.vector_store %arg12[%c0_16, %c0_17], %14 {strides = array<i32>} : memref<8x1xf32, #tpu.memory_space<vmem>>, vector<8x1xf32>,
    %c0_i32_18 = arith.constant 0 : i32
    %27 = arith.cmpi eq, %arg1, %c0_i32_18 : i32
    %28 = arith.extui %27 : i1 to i32
    %c0_i32_19 = arith.constant 0 : i32
    %29 = arith.cmpi ne, %28, %c0_i32_19 : i32
    scf.if %29 {
      %c0_20 = arith.constant 0 : index
      %c0_21 = arith.constant 0 : index
      %30 = vector.load %arg10[%c0_20, %c0_21] : memref<8x256xf32, #tpu.memory_space<vmem>>, vector<8x256xf32>
      %c0_22 = arith.constant 0 : index
      %c0_23 = arith.constant 0 : index
      %31 = vector.load %arg12[%c0_22, %c0_23] : memref<8x1xf32, #tpu.memory_space<vmem>>, vector<8x1xf32>
      %c0_24 = arith.constant 0 : index
      %c0_25 = arith.constant 0 : index
      %32 = vector.load %arg13[%c0_24, %c0_25] : memref<8x1xf32, #tpu.memory_space<vmem>>, vector<8x1xf32>
      %33 = math.log %32 : vector<8x1xf32>
      %34 = arith.addf %31, %33 : vector<8x1xf32>
      %35 = vector.broadcast %34 : vector<8x1xf32> to vector<8x256xf32>
      %36 = arith.subf %30, %35 : vector<8x256xf32>
      %c0_26 = arith.constant 0 : index
      %c0_27 = arith.constant 0 : index
      %37 = vector.load %arg10[%c0_26, %c0_27] : memref<8x256xf32, #tpu.memory_space<vmem>>, vector<8x256xf32>
      tpu.vector_store %arg10[%c0_26, %c0_27], %36 {strides = array<i32>} : memref<8x256xf32, #tpu.memory_space<vmem>>, vector<8x256xf32>,
    } else {
    }
    return
  }
  func.func @transform_0(%arg0: i32, %arg1: i32) -> (i32, i32) {
    %c0_i32 = arith.constant 0 : i32
    %c0_i32_0 = arith.constant 0 : i32
    return %arg0, %c0_i32 : i32, i32
  }
  func.func @transform_1(%arg0: i32, %arg1: i32) -> (i32, i32) {
    %c0_i32 = arith.constant 0 : i32
    %c0_i32_0 = arith.constant 0 : i32
    return %arg0, %c0_i32 : i32, i32
  }
  func.func @transform_2(%arg0: i32, %arg1: i32) -> (i32, i32) {
    %c0_i32 = arith.constant 0 : i32
    %c0_i32_0 = arith.constant 0 : i32
    %c0_i32_1 = arith.constant 0 : i32
    return %c0_i32, %c0_i32_0 : i32, i32
  }
  func.func @transform_3(%arg0: i32, %arg1: i32) -> (i32, i32) {
    %c0_i32 = arith.constant 0 : i32
    %c0_i32_0 = arith.constant 0 : i32
    %c0_i32_1 = arith.constant 0 : i32
    return %c0_i32, %c0_i32_0 : i32, i32
  }
  func.func @transform_4(%arg0: i32, %arg1: i32) -> (i32, i32) {
    %c0_i32 = arith.constant 0 : i32
    %c0_i32_0 = arith.constant 0 : i32
    %c0_i32_1 = arith.constant 0 : i32
    return %c0_i32, %c0_i32_0 : i32, i32
  }
  func.func @transform_5(%arg0: i32, %arg1: i32) -> (i32, i32) {
    %c0_i32 = arith.constant 0 : i32
    %c0_i32_0 = arith.constant 0 : i32
    %c0_i32_1 = arith.constant 0 : i32
    return %c0_i32, %c0_i32_0 : i32, i32
  }
  func.func @transform_6(%arg0: i32, %arg1: i32) -> (i32, i32) {
    %c0_i32 = arith.constant 0 : i32
    %c0_i32_0 = arith.constant 0 : i32
    return %c0_i32, %arg1 : i32, i32
  }
  func.func @transform_7(%arg0: i32, %arg1: i32) -> (i32, i32) {
    %c0_i32 = arith.constant 0 : i32
    %c0_i32_0 = arith.constant 0 : i32
    return %c0_i32, %arg1 : i32, i32
  }
  func.func @transform_8(%arg0: i32, %arg1: i32) -> (i32, i32) {
    %c0_i32 = arith.constant 0 : i32
    %c0_i32_0 = arith.constant 0 : i32
    return %arg0, %c0_i32 : i32, i32
  }
}

</mosaic_0001>

<llo_original>
// kernel: tpu_custom_call.1
$region0: #{tpu_custom_call.1}
  #allocation0 [shape = 'u32[]', space=smem, size = 0x4, offset = 0x4, fixed_abs, tag = 'smem constant byte address 0x4 - core index']
  #allocation1 [shape = 'u32[144,128]{1,0:T(1,128)}', space=vmem, size = 0x12000, scoped, tag = 'internal scratch']
  #allocation2 [shape = 'f32[8,256]{1,0:T(8,128)}', space=vmem, size = 0x2000, scoped, tag = 'scratch operand']
  #allocation3 [shape = 'f32[8,1]{1,0:T(8,128)}', space=vmem, size = 0x1000, scoped, tag = 'scratch operand']
  #allocation4 [shape = 'f32[8,1]{1,0:T(8,128)}', space=vmem, size = 0x1000, scoped, tag = 'scratch operand']
  %s0 = inlined_call_operand.hbm [shape: f32[8,128], index: 0, kind: input, shape index: {}]
  %s1 = inlined_call_operand.hbm [shape: f32[8,128], index: 1, kind: input, shape index: {}]
  %s2 = inlined_call_operand.hbm [shape: bf16[128,128], index: 2, kind: input, shape index: {}]
  %s3 = inlined_call_operand.vmem [shape: f32[1,128], index: 3, kind: input, shape index: {}]
  %s4 = inlined_call_operand.hbm [shape: bf16[128,128], index: 4, kind: input, shape index: {}]
  %s5 = inlined_call_operand.vmem [shape: f32[1,128], index: 5, kind: input, shape index: {}]
  %s6 = inlined_call_operand.hbm [shape: bf16[256,256], index: 6, kind: input, shape index: {}]
  %s7 = inlined_call_operand.vmem [shape: f32[1,256], index: 7, kind: input, shape index: {}]
  %s8 = inlined_call_operand.hbm [shape: f32[8,256], index: 8, kind: output, shape index: {}]
  %s9 = sld [smem:[#allocation0]]
  $region70: #{tpu_custom_call.1} parent=0
    _
  %s11 = ssub.s32 1, %s9
  %s12 = scalar_select 0, %s11, %s9
  $region1: #{tpu_custom_call.1} parent=0
    #allocation5 [shape = 'u8[4096]{0}', space=vmem, size = 0x1000, scoped, tag = 'input window, operand 0, single buffered']
    #allocation6 [shape = 's32[1]{0}', space=sflag, size = 0x4, scoped, tag = 'scoped memory for tpu_custom_call.1']
    #allocation7 [shape = 's32[1]{0}', space=sflag, size = 0x4, scoped, tag = 'scoped memory for tpu_custom_call.1']
    #allocation8 [shape = 'u8[4096]{0}', space=vmem, size = 0x1000, scoped, tag = 'input window, operand 1, single buffered']
    #allocation9 [shape = 's32[1]{0}', space=sflag, size = 0x4, scoped, tag = 'scoped memory for tpu_custom_call.1']
    #allocation10 [shape = 'u8[32768]{0}', space=vmem, size = 0x8000, scoped, tag = 'input window, operand 2, single buffered']
    #allocation11 [shape = 'u8[32768]{0}', space=vmem, size = 0x8000, scoped, tag = 'input window, operand 4, single buffered']
    #allocation12 [shape = 's32[1]{0}', space=sflag, size = 0x4, scoped, tag = 'scoped memory for tpu_custom_call.1']
    #allocation13 [shape = 'u8[131072]{0}', space=vmem, size = 0x20000, scoped, tag = 'input window, operand 6, single buffered']
    #allocation14 [shape = 'u8[8192]{0}', space=vmem, size = 0x2000, scoped, tag = 'output window, operand 0, single buffered']
    %13 = vsyncpa [#allocation6], 0
    %14 = vsyncpa [#allocation9], 0
    %15 = vsyncpa [#allocation12], 0
    %16 = vsyncpa [#allocation7], 0
    // Predicated region
    $region2: #{tpu_custom_call.1} parent=1 // pred_check
      _
    $region3: #{tpu_custom_call.1} parent=1 // pred_check_branch
      %18 = sbr.rel (0) target = $region5
    $region4: #{tpu_custom_call.1} parent=1 // pred_region
      %s20 = ssub.s32 128, 128
      %21 = vsyncadd [#allocation6], %s20
      %s23 = sshll.u32 [#allocation5], 4
      %s24 = int_to_ptr.vmem [resolvable:$true] %s23
      %26 = dma.hbm_to_vmem [thread:$0]  %s0, 128, %s24, [#allocation6]
    $region5: #{tpu_custom_call.1} parent=1 // pred_fallthru
      _
    // Predicated region
    $region6: #{tpu_custom_call.1} parent=1 // pred_check
      _
    $region7: #{tpu_custom_call.1} parent=1 // pred_check_branch
      %28 = sbr.rel (0) target = $region9
    $region8: #{tpu_custom_call.1} parent=1 // pred_region
      %s30 = ssub.s32 128, 128
      %31 = vsyncadd [#allocation9], %s30
      %s33 = sshll.u32 [#allocation8], 4
      %s34 = int_to_ptr.vmem [resolvable:$true] %s33
      %36 = dma.hbm_to_vmem [thread:$0]  %s1, 128, %s34, [#allocation9]
    $region9: #{tpu_custom_call.1} parent=1 // pred_fallthru
      _
    // Predicated region
    $region10: #{tpu_custom_call.1} parent=1 // pred_check
      _
    $region11: #{tpu_custom_call.1} parent=1 // pred_check_branch
      %38 = sbr.rel (0) target = $region13
    $region12: #{tpu_custom_call.1} parent=1 // pred_region
      %s40 = ssub.s32 1024, 1024
      %41 = vsyncadd [#allocation9], %s40
      %s42 = sshll.u32 [#allocation10], 4
      %s43 = int_to_ptr.vmem [resolvable:$true] %s42
      %48 = dma.hbm_to_vmem [thread:$0]  %s2, 1024, %s43, [#allocation9], 64, 64, 4
    $region13: #{tpu_custom_call.1} parent=1 // pred_fallthru
      _
    // Predicated region
    $region14: #{tpu_custom_call.1} parent=1 // pred_check
      _
    $region15: #{tpu_custom_call.1} parent=1 // pred_check_branch
      %50 = sbr.rel (0) target = $region17
    $region16: #{tpu_custom_call.1} parent=1 // pred_region
      _
    $region17: #{tpu_custom_call.1} parent=1 // pred_fallthru
      _
    // Predicated region
    $region18: #{tpu_custom_call.1} parent=1 // pred_check
      _
    $region19: #{tpu_custom_call.1} parent=1 // pred_check_branch
      %52 = sbr.rel (0) target = $region21
    $region20: #{tpu_custom_call.1} parent=1 // pred_region
      %s54 = ssub.s32 1024, 1024
      %55 = vsyncadd [#allocation12], %s54
      %s56 = sshll.u32 [#allocation11], 4
      %s57 = int_to_ptr.vmem [resolvable:$true] %s56
      %62 = dma.hbm_to_vmem [thread:$0]  %s4, 1024, %s57, [#allocation12], 64, 64, 4
    $region21: #{tpu_custom_call.1} parent=1 // pred_fallthru
      _
    // Predicated region
    $region22: #{tpu_custom_call.1} parent=1 // pred_check
      _
    $region23: #{tpu_custom_call.1} parent=1 // pred_check_branch
      %64 = sbr.rel (0) target = $region25
    $region24: #{tpu_custom_call.1} parent=1 // pred_region
      _
    $region25: #{tpu_custom_call.1} parent=1 // pred_fallthru
      _
    // Predicated region
    $region26: #{tpu_custom_call.1} parent=1 // pred_check
      _
    $region27: #{tpu_custom_call.1} parent=1 // pred_check_branch
      %66 = sbr.rel (0) target = $region29
    $region28: #{tpu_custom_call.1} parent=1 // pred_region
      %s68 = ssub.s32 4096, 4096
      %69 = vsyncadd [#allocation12], %s68
      %s70 = sshll.u32 [#allocation13], 4
      %s71 = int_to_ptr.vmem [resolvable:$true] %s70
      %76 = dma.hbm_to_vmem [thread:$0]  %s6, 4096, %s71, [#allocation12], 128, 128, 8
    $region29: #{tpu_custom_call.1} parent=1 // pred_fallthru
      _
    // Predicated region
    $region30: #{tpu_custom_call.1} parent=1 // pred_check
      _
    $region31: #{tpu_custom_call.1} parent=1 // pred_check_branch
      %78 = sbr.rel (0) target = $region33
    $region32: #{tpu_custom_call.1} parent=1 // pred_region
      _
    $region33: #{tpu_custom_call.1} parent=1 // pred_fallthru
      _
    // Predicated region
    $region34: #{tpu_custom_call.1} parent=1 // pred_check
      _
    $region35: #{tpu_custom_call.1} parent=1 // pred_check_branch
      %80 = sbr.rel (0) target = $region37
    $region36: #{tpu_custom_call.1} parent=1 // pred_region
      %81 = dma.done [#allocation6], 128
    $region37: #{tpu_custom_call.1} parent=1 // pred_fallthru
      _
    // Predicated region
    $region38: #{tpu_custom_call.1} parent=1 // pred_check
      _
    $region39: #{tpu_custom_call.1} parent=1 // pred_check_branch
      %83 = sbr.rel (0) target = $region41
    $region40: #{tpu_custom_call.1} parent=1 // pred_region
      %84 = dma.done [#allocation9], 128
    $region41: #{tpu_custom_call.1} parent=1 // pred_fallthru
      _
    // Predicated region
    $region42: #{tpu_custom_call.1} parent=1 // pred_check
      _
    $region43: #{tpu_custom_call.1} parent=1 // pred_check_branch
      %86 = sbr.rel (0) target = $region45
    $region44: #{tpu_custom_call.1} parent=1 // pred_region
      %87 = dma.done [#allocation9], 1024
    $region45: #{tpu_custom_call.1} parent=1 // pred_fallthru
      _
    // Predicated region
    $region46: #{tpu_custom_call.1} parent=1 // pred_check
      _
    $region47: #{tpu_custom_call.1} parent=1 // pred_check_branch
      %89 = sbr.rel (0) target = $region49
    $region48: #{tpu_custom_call.1} parent=1 // pred_region
      %90 = dma.done [#allocation12], 1024
    $region49: #{tpu_custom_call.1} parent=1 // pred_fallthru
      _
    // Predicated region
    $region50: #{tpu_custom_call.1} parent=1 // pred_check
      _
    $region51: #{tpu_custom_call.1} parent=1 // pred_check_branch
      %92 = sbr.rel (0) target = $region53
    $region52: #{tpu_custom_call.1} parent=1 // pred_region
      %93 = dma.done [#allocation12], 4096
    $region53: #{tpu_custom_call.1} parent=1 // pred_fallthru
      _
    %p95 = scmp.eq.s32.totalorder 0, 0
    // Predicated region
    $region54: #{tpu_custom_call.1} parent=1 // pred_check
      %p96 = pneg %p95
    $region55: #{tpu_custom_call.1} parent=1 // pred_check_branch
      %98 = sbr.rel (%p96) target = $region57
    $region56: #{tpu_custom_call.1} parent=1 // pred_region
      %v99 = vld [vmem:[#allocation5] sm:$0xff]
      %v100 = vpack.c.bf16 %v99, %v99
      %v101 = vld [vmem:[#allocation10] sm:$0xf]
      %v102 = vld [vmem:[#allocation10 + $0x4] sm:$0xf]
      %v103 = vld [vmem:[#allocation10 + $0x8] sm:$0xf]
      %v104 = vld [vmem:[#allocation10 + $0xc] sm:$0xf]
      %v105 = vld [vmem:[#allocation10 + $0x10] sm:$0xf]
      %v106 = vld [vmem:[#allocation10 + $0x14] sm:$0xf]
      %v107 = vld [vmem:[#allocation10 + $0x18] sm:$0xf]
      %v108 = vld [vmem:[#allocation10 + $0x1c] sm:$0xf]
      %v109 = vld [vmem:[#allocation10 + $0x20] sm:$0xf]
      %v110 = vld [vmem:[#allocation10 + $0x24] sm:$0xf]
      %v111 = vld [vmem:[#allocation10 + $0x28] sm:$0xf]
      %v112 = vld [vmem:[#allocation10 + $0x2c] sm:$0xf]
      %v113 = vld [vmem:[#allocation10 + $0x30] sm:$0xf]
      %v114 = vld [vmem:[#allocation10 + $0x34] sm:$0xf]
      %v115 = vld [vmem:[#allocation10 + $0x38] sm:$0xf]
      %v116 = vld [vmem:[#allocation10 + $0x3c] sm:$0xf]
      %v117 = vld [vmem:[%s3] sm:$0x1]
      %v119 = vlaneseq
      %v120 = vshrl.u32 %v119, 7
      %v121 = vsub.s32 0, %v120
      %v122 = vrot.slane %v117, %v121
      %v140 = vunpack.c.l.b16 %v101
      %v141 = vunpack.c.l.b16 %v102
      %v142 = vunpack.c.l.b16 %v103
      %v143 = vunpack.c.l.b16 %v104
      %v144 = vunpack.c.l.b16 %v105
      %v145 = vunpack.c.l.b16 %v106
      %v146 = vunpack.c.l.b16 %v107
      %v147 = vunpack.c.l.b16 %v108
      %v148 = vunpack.c.l.b16 %v109
      %v149 = vunpack.c.l.b16 %v110
      %v150 = vunpack.c.l.b16 %v111
      %v151 = vunpack.c.l.b16 %v112
      %v152 = vunpack.c.l.b16 %v113
      %v153 = vunpack.c.l.b16 %v114
      %v154 = vunpack.c.l.b16 %v115
      %v155 = vunpack.c.l.b16 %v116
      %v156 = vpack.c.b16 %v141, %v140
      %v157 = vpack.c.b16 %v143, %v142
      %v158 = vpack.c.b16 %v145, %v144
      %v159 = vpack.c.b16 %v147, %v146
      %v160 = vpack.c.b16 %v149, %v148
      %v161 = vpack.c.b16 %v151, %v150
      %v162 = vpack.c.b16 %v153, %v152
      %v163 = vpack.c.b16 %v155, %v154
      %172 = vmatprep.subr.bf16.mxu0 0
      %173 = vmatpush1.bf16.msra.mxu0 %v156
      %174 = vmatprep.subr.bf16.mxu0 0
      %175 = vmatpush1.bf16.msra.mxu0 %v157
      %176 = vmatprep.subr.bf16.mxu0 0
      %177 = vmatpush1.bf16.msra.mxu0 %v158
      %178 = vmatprep.subr.bf16.mxu0 0
      %179 = vmatpush1.bf16.msra.mxu0 %v159
      %180 = vmatprep.subr.bf16.mxu0 0
      %181 = vmatpush1.bf16.msra.mxu0 %v160
      %182 = vmatprep.subr.bf16.mxu0 0
      %183 = vmatpush1.bf16.msra.mxu0 %v161
      %184 = vmatprep.subr.bf16.mxu0 0
      %185 = vmatpush1.bf16.msra.mxu0 %v162
      %186 = vmatprep.subr.bf16.mxu0 0
      %187 = vmatpush1.bf16.msra.mxu0 %v163
      %188 = vmatprep.subr.bf16.mxu0 0
      %189 = vmatpush1.bf16.msra.mxu0 0
      %190 = vmatprep.subr.bf16.mxu0 0
      %191 = vmatpush1.bf16.msra.mxu0 0
      %192 = vmatprep.subr.bf16.mxu0 0
      %193 = vmatpush1.bf16.msra.mxu0 0
      %194 = vmatprep.subr.bf16.mxu0 0
      %195 = vmatpush1.bf16.msra.mxu0 0
      %196 = vmatprep.subr.bf16.mxu0 0
      %197 = vmatpush1.bf16.msra.mxu0 0
      %198 = vmatprep.subr.bf16.mxu0 0
      %199 = vmatpush1.bf16.msra.mxu0 0
      %200 = vmatprep.subr.bf16.mxu0 0
      %201 = vmatpush1.bf16.msra.mxu0 0
      %202 = vmatprep.subr.bf16.mxu0 0
      %203 = vmatpush1.bf16.msra.mxu0 0
      %204 = vmatprep.mubr.bf16.mxu0 0
      %205 = vmatmul.mubr.bf16.gmra.mrb[0].mxu0 %v100
      %v206 = vpop.f32.mrb[0].mxu0
      %v207 = vadd.f32 %v122, %v206
      %v208 = vpop.f32.mrb[0].mxu0
      %v209 = vpop.f32.mrb[0].mxu0
      %v210 = vpop.f32.mrb[0].mxu0
      %211 = vdwg.mxu0
      %v212 = vld [vmem:[#allocation8] sm:$0xff]
      %v213 = vpack.c.bf16 %v212, %v212
      %v214 = vld [vmem:[#allocation11] sm:$0xf]
      %v215 = vld [vmem:[#allocation11 + $0x4] sm:$0xf]
      %v216 = vld [vmem:[#allocation11 + $0x8] sm:$0xf]
      %v217 = vld [vmem:[#allocation11 + $0xc] sm:$0xf]
      %v218 = vld [vmem:[#allocation11 + $0x10] sm:$0xf]
      %v219 = vld [vmem:[#allocation11 + $0x14] sm:$0xf]
      %v220 = vld [vmem:[#allocation11 + $0x18] sm:$0xf]
      %v221 = vld [vmem:[#allocation11 + $0x1c] sm:$0xf]
      %v222 = vld [vmem:[#allocation11 + $0x20] sm:$0xf]
      %v223 = vld [vmem:[#allocation11 + $0x24] sm:$0xf]
      %v224 = vld [vmem:[#allocation11 + $0x28] sm:$0xf]
      %v225 = vld [vmem:[#allocation11 + $0x2c] sm:$0xf]
      %v226 = vld [vmem:[#allocation11 + $0x30] sm:$0xf]
      %v227 = vld [vmem:[#allocation11 + $0x34] sm:$0xf]
      %v228 = vld [vmem:[#allocation11 + $0x38] sm:$0xf]
      %v229 = vld [vmem:[#allocation11 + $0x3c] sm:$0xf]
      %v230 = vld [vmem:[%s5] sm:$0x1]
      %v232 = vlaneseq
      %v233 = vshrl.u32 %v232, 7
      %v234 = vsub.s32 0, %v233
      %v235 = vrot.slane %v230, %v234
      %v253 = vunpack.c.l.b16 %v214
      %v254 = vunpack.c.l.b16 %v215
      %v255 = vunpack.c.l.b16 %v216
      %v256 = vunpack.c.l.b16 %v217
      %v257 = vunpack.c.l.b16 %v218
      %v258 = vunpack.c.l.b16 %v219
      %v259 = vunpack.c.l.b16 %v220
      %v260 = vunpack.c.l.b16 %v221
      %v261 = vunpack.c.l.b16 %v222
      %v262 = vunpack.c.l.b16 %v223
      %v263 = vunpack.c.l.b16 %v224
      %v264 = vunpack.c.l.b16 %v225
      %v265 = vunpack.c.l.b16 %v226
      %v266 = vunpack.c.l.b16 %v227
      %v267 = vunpack.c.l.b16 %v228
      %v268 = vunpack.c.l.b16 %v229
      %v269 = vpack.c.b16 %v254, %v253
      %v270 = vpack.c.b16 %v256, %v255
      %v271 = vpack.c.b16 %v258, %v257
      %v272 = vpack.c.b16 %v260, %v259
      %v273 = vpack.c.b16 %v262, %v261
      %v274 = vpack.c.b16 %v264, %v263
      %v275 = vpack.c.b16 %v266, %v265
      %v276 = vpack.c.b16 %v268, %v267
      %285 = vmatprep.subr.bf16.mxu0 0
      %286 = vmatpush1.bf16.msra.mxu0 %v269
      %287 = vmatprep.subr.bf16.mxu0 0
      %288 = vmatpush1.bf16.msra.mxu0 %v270
      %289 = vmatprep.subr.bf16.mxu0 0
      %290 = vmatpush1.bf16.msra.mxu0 %v271
      %291 = vmatprep.subr.bf16.mxu0 0
      %292 = vmatpush1.bf16.msra.mxu0 %v272
      %293 = vmatprep.subr.bf16.mxu0 0
      %294 = vmatpush1.bf16.msra.mxu0 %v273
      %295 = vmatprep.subr.bf16.mxu0 0
      %296 = vmatpush1.bf16.msra.mxu0 %v274
      %297 = vmatprep.subr.bf16.mxu0 0
      %298 = vmatpush1.bf16.msra.mxu0 %v275
      %299 = vmatprep.subr.bf16.mxu0 0
      %300 = vmatpush1.bf16.msra.mxu0 %v276
      %301 = vmatprep.subr.bf16.mxu0 0
      %302 = vmatpush1.bf16.msra.mxu0 0
      %303 = vmatprep.subr.bf16.mxu0 0
      %304 = vmatpush1.bf16.msra.mxu0 0
      %305 = vmatprep.subr.bf16.mxu0 0
      %306 = vmatpush1.bf16.msra.mxu0 0
      %307 = vmatprep.subr.bf16.mxu0 0
      %308 = vmatpush1.bf16.msra.mxu0 0
      %309 = vmatprep.subr.bf16.mxu0 0
      %310 = vmatpush1.bf16.msra.mxu0 0
      %311 = vmatprep.subr.bf16.mxu0 0
      %312 = vmatpush1.bf16.msra.mxu0 0
      %313 = vmatprep.subr.bf16.mxu0 0
      %314 = vmatpush1.bf16.msra.mxu0 0
      %315 = vmatprep.subr.bf16.mxu0 0
      %316 = vmatpush1.bf16.msra.mxu0 0
      %317 = vmatprep.mubr.bf16.mxu0 0
      %318 = vmatmul.mubr.bf16.gmra.mrb[0].mxu0 %v213
      %v319 = vpop.f32.mrb[0].mxu0
      %v320 = vadd.f32 %v235, %v319
      %v321 = vpop.f32.mrb[0].mxu0
      %v322 = vpop.f32.mrb[0].mxu0
      %v323 = vpop.f32.mrb[0].mxu0
      %324 = vdwg.mxu0
      %325 = vst [vmem:[#allocation2] sm:$0xff] %v207
      %326 = vst [vmem:[#allocation2 + $0x8] sm:$0xff] %v320
      %vm327 = vcmask 7168
      %328 = vst.msk [vmem:[#allocation3] sm:$0xff] %vm327, -inf
      %329 = vst.msk [vmem:[#allocation4] sm:$0xff] %vm327, 0.0
    $region57: #{tpu_custom_call.1} parent=1 // pred_fallthru
      _
    %v330 = vld [vmem:[#allocation2] sm:$0xff]
    %v331 = vld [vmem:[#allocation2 + $0x8] sm:$0xff]
    %v332 = vpack.c.bf16 %v330, %v330
    %v333 = vpack.c.bf16 %v331, %v331
    %v334 = vld [vmem:[#allocation13] sm:$0xff]
    %v335 = vld [vmem:[#allocation13 + $0x8] sm:$0xff]
    %v336 = vld [vmem:[#allocation13 + $0x10] sm:$0xff]
    %v337 = vld [vmem:[#allocation13 + $0x18] sm:$0xff]
    %v338 = vld [vmem:[#allocation13 + $0x20] sm:$0xff]
    %v339 = vld [vmem:[#allocation13 + $0x28] sm:$0xff]
    %v340 = vld [vmem:[#allocation13 + $0x30] sm:$0xff]
    %v341 = vld [vmem:[#allocation13 + $0x38] sm:$0xff]
    %v342 = vld [vmem:[#allocation13 + $0x40] sm:$0xff]
    %v343 = vld [vmem:[#allocation13 + $0x48] sm:$0xff]
    %v344 = vld [vmem:[#allocation13 + $0x50] sm:$0xff]
    %v345 = vld [vmem:[#allocation13 + $0x58] sm:$0xff]
    %v346 = vld [vmem:[#allocation13 + $0x60] sm:$0xff]
    %v347 = vld [vmem:[#allocation13 + $0x68] sm:$0xff]
    %v348 = vld [vmem:[#allocation13 + $0x70] sm:$0xff]
    %v349 = vld [vmem:[#allocation13 + $0x78] sm:$0xff]
    %v350 = vld [vmem:[#allocation13 + $0x80] sm:$0xff]
    %v351 = vld [vmem:[#allocation13 + $0x88] sm:$0xff]
    %v352 = vld [vmem:[#allocation13 + $0x90] sm:$0xff]
    %v353 = vld [vmem:[#allocation13 + $0x98] sm:$0xff]
    %v354 = vld [vmem:[#allocation13 + $0xa0] sm:$0xff]
    %v355 = vld [vmem:[#allocation13 + $0xa8] sm:$0xff]
    %v356 = vld [vmem:[#allocation13 + $0xb0] sm:$0xff]
    %v357 = vld [vmem:[#allocation13 + $0xb8] sm:$0xff]
    %v358 = vld [vmem:[#allocation13 + $0xc0] sm:$0xff]
    %v359 = vld [vmem:[#allocation13 + $0xc8] sm:$0xff]
    %v360 = vld [vmem:[#allocation13 + $0xd0] sm:$0xff]
    %v361 = vld [vmem:[#allocation13 + $0xd8] sm:$0xff]
    %v362 = vld [vmem:[#allocation13 + $0xe0] sm:$0xff]
    %v363 = vld [vmem:[#allocation13 + $0xe8] sm:$0xff]
    %v364 = vld [vmem:[#allocation13 + $0xf0] sm:$0xff]
    %v365 = vld [vmem:[#allocation13 + $0xf8] sm:$0xff]
    %v366 = vld [vmem:[%s7] sm:$0x3]
    %v368 = vlaneseq
    %v369 = vshrl.u32 %v368, 7
    %v370 = vsub.s32 0, %v369
    %v371 = vrot.slane %v366, %v370
    %v372 = vlaneseq
    %v373 = vshrl.u32 %v372, 7
    %v374 = vsub.s32 1, %v373
    %v375 = vrot.slane %v366, %v374
    %v410 = vunpack.c.l.b16 %v334
    %v411 = vunpack.c.h.b16 %v334
    %v412 = vunpack.c.l.b16 %v335
    %v413 = vunpack.c.h.b16 %v335
    %v414 = vunpack.c.l.b16 %v336
    %v415 = vunpack.c.h.b16 %v336
    %v416 = vunpack.c.l.b16 %v337
    %v417 = vunpack.c.h.b16 %v337
    %v418 = vunpack.c.l.b16 %v338
    %v419 = vunpack.c.h.b16 %v338
    %v420 = vunpack.c.l.b16 %v339
    %v421 = vunpack.c.h.b16 %v339
    %v422 = vunpack.c.l.b16 %v340
    %v423 = vunpack.c.h.b16 %v340
    %v424 = vunpack.c.l.b16 %v341
    %v425 = vunpack.c.h.b16 %v341
    %v426 = vunpack.c.l.b16 %v342
    %v427 = vunpack.c.h.b16 %v342
    %v428 = vunpack.c.l.b16 %v343
    %v429 = vunpack.c.h.b16 %v343
    %v430 = vunpack.c.l.b16 %v344
    %v431 = vunpack.c.h.b16 %v344
    %v432 = vunpack.c.l.b16 %v345
    %v433 = vunpack.c.h.b16 %v345
    %v434 = vunpack.c.l.b16 %v346
    %v435 = vunpack.c.h.b16 %v346
    %v436 = vunpack.c.l.b16 %v347
    %v437 = vunpack.c.h.b16 %v347
    %v438 = vunpack.c.l.b16 %v348
    %v439 = vunpack.c.h.b16 %v348
    %v440 = vunpack.c.l.b16 %v349
    %v441 = vunpack.c.h.b16 %v349
    %v442 = vunpack.c.l.b16 %v350
    %v443 = vunpack.c.h.b16 %v350
    %v444 = vunpack.c.l.b16 %v351
    %v445 = vunpack.c.h.b16 %v351
    %v446 = vunpack.c.l.b16 %v352
    %v447 = vunpack.c.h.b16 %v352
    %v448 = vunpack.c.l.b16 %v353
    %v449 = vunpack.c.h.b16 %v353
    %v450 = vunpack.c.l.b16 %v354
    %v451 = vunpack.c.h.b16 %v354
    %v452 = vunpack.c.l.b16 %v355
    %v453 = vunpack.c.h.b16 %v355
    %v454 = vunpack.c.l.b16 %v356
    %v455 = vunpack.c.h.b16 %v356
    %v456 = vunpack.c.l.b16 %v357
    %v457 = vunpack.c.h.b16 %v357
    %v458 = vunpack.c.l.b16 %v358
    %v459 = vunpack.c.h.b16 %v358
    %v460 = vunpack.c.l.b16 %v359
    %v461 = vunpack.c.h.b16 %v359
    %v462 = vunpack.c.l.b16 %v360
    %v463 = vunpack.c.h.b16 %v360
    %v464 = vunpack.c.l.b16 %v361
    %v465 = vunpack.c.h.b16 %v361
    %v466 = vunpack.c.l.b16 %v362
    %v467 = vunpack.c.h.b16 %v362
    %v468 = vunpack.c.l.b16 %v363
    %v469 = vunpack.c.h.b16 %v363
    %v470 = vunpack.c.l.b16 %v364
    %v471 = vunpack.c.h.b16 %v364
    %v472 = vunpack.c.l.b16 %v365
    %v473 = vunpack.c.h.b16 %v365
    %v474 = vpack.c.b16 %v412, %v410
    %v475 = vpack.c.b16 %v413, %v411
    %v476 = vpack.c.b16 %v416, %v414
    %v477 = vpack.c.b16 %v417, %v415
    %v478 = vpack.c.b16 %v420, %v418
    %v479 = vpack.c.b16 %v421, %v419
    %v480 = vpack.c.b16 %v424, %v422
    %v481 = vpack.c.b16 %v425, %v423
    %v482 = vpack.c.b16 %v428, %v426
    %v483 = vpack.c.b16 %v429, %v427
    %v484 = vpack.c.b16 %v432, %v430
    %v485 = vpack.c.b16 %v433, %v431
    %v486 = vpack.c.b16 %v436, %v434
    %v487 = vpack.c.b16 %v437, %v435
    %v488 = vpack.c.b16 %v440, %v438
    %v489 = vpack.c.b16 %v441, %v439
    %v490 = vpack.c.b16 %v444, %v442
    %v491 = vpack.c.b16 %v445, %v443
    %v492 = vpack.c.b16 %v448, %v446
    %v493 = vpack.c.b16 %v449, %v447
    %v494 = vpack.c.b16 %v452, %v450
    %v495 = vpack.c.b16 %v453, %v451
    %v496 = vpack.c.b16 %v456, %v454
    %v497 = vpack.c.b16 %v457, %v455
    %v498 = vpack.c.b16 %v460, %v458
    %v499 = vpack.c.b16 %v461, %v459
    %v500 = vpack.c.b16 %v464, %v462
    %v501 = vpack.c.b16 %v465, %v463
    %v502 = vpack.c.b16 %v468, %v466
    %v503 = vpack.c.b16 %v469, %v467
    %v504 = vpack.c.b16 %v472, %v470
    %v505 = vpack.c.b16 %v473, %v471
    %538 = vmatprep.subr.bf16.mxu0 %v475
    %539 = vmatpush1.bf16.msra.mxu0 %v474
    %540 = vmatprep.subr.bf16.mxu0 %v477
    %541 = vmatpush1.bf16.msra.mxu0 %v476
    %542 = vmatprep.subr.bf16.mxu0 %v479
    %543 = vmatpush1.bf16.msra.mxu0 %v478
    %544 = vmatprep.subr.bf16.mxu0 %v481
    %545 = vmatpush1.bf16.msra.mxu0 %v480
    %546 = vmatprep.subr.bf16.mxu0 %v483
    %547 = vmatpush1.bf16.msra.mxu0 %v482
    %548 = vmatprep.subr.bf16.mxu0 %v485
    %549 = vmatpush1.bf16.msra.mxu0 %v484
    %550 = vmatprep.subr.bf16.mxu0 %v487
    %551 = vmatpush1.bf16.msra.mxu0 %v486
    %552 = vmatprep.subr.bf16.mxu0 %v489
    %553 = vmatpush1.bf16.msra.mxu0 %v488
    %554 = vmatprep.subr.bf16.mxu0 %v491
    %555 = vmatpush1.bf16.msra.mxu0 %v490
    %556 = vmatprep.subr.bf16.mxu0 %v493
    %557 = vmatpush1.bf16.msra.mxu0 %v492
    %558 = vmatprep.subr.bf16.mxu0 %v495
    %559 = vmatpush1.bf16.msra.mxu0 %v494
    %560 = vmatprep.subr.bf16.mxu0 %v497
    %561 = vmatpush1.bf16.msra.mxu0 %v496
    %562 = vmatprep.subr.bf16.mxu0 %v499
    %563 = vmatpush1.bf16.msra.mxu0 %v498
    %564 = vmatprep.subr.bf16.mxu0 %v501
    %565 = vmatpush1.bf16.msra.mxu0 %v500
    %566 = vmatprep.subr.bf16.mxu0 %v503
    %567 = vmatpush1.bf16.msra.mxu0 %v502
    %568 = vmatprep.subr.bf16.mxu0 %v505
    %569 = vmatpush1.bf16.msra.mxu0 %v504
    %570 = vmatprep.mubr.bf16.mxu0 %v333
    %571 = vmatmul.mubr.bf16.gmra.mrb[0].mxu0 %v332
    %v572 = vpop.f32.mrb[0].mxu0
    %v573 = vadd.f32 %v371, %v572
    %v574 = vpop.f32.mrb[0].mxu0
    %v575 = vadd.f32 %v375, %v574
    %v576 = vpop.f32.mrb[0].mxu0
    %v577 = vpop.f32.mrb[0].mxu0
    %578 = vdwg.mxu0
    %579 = vst [vmem:[#allocation14] sm:$0xff] %v573
    %580 = vst [vmem:[#allocation14 + $0x8] sm:$0xff] %v575
    %v581 = vld [vmem:[#allocation3] sm:$0xff]
    %v582 = vmax.f32 %v573, %v575
    %583 = vmax.xlane.f32.xlu0 %v582
    %v584 = vpop.xlane.xlu0 %583
    %v585 = vmax.f32 %v581, %v584
    %v586 = vld [vmem:[#allocation4] sm:$0xff]
    %v587 = vsub.f32 %v581, %v585
    %v588 = vmul.f32 %v587, 1.442695
    %v589 = vpow.pop %v588
    %v590 = vmul.f32 %v586, %v589
    %592 = vset.pattern.permute.xlu0 0
    %593 = vperm.xlu0 %592, %v585
    %v594 = vpop.permute.xlu0 %593
    %v596 = vsub.f32 %v573, %v594
    %v597 = vsub.f32 %v575, %v594
    %v598 = vmul.f32 %v596, 1.442695
    %v599 = vpow.pop %v598
    %v600 = vmul.f32 %v597, 1.442695
    %v601 = vpow.pop %v600
    %v602 = vadd.f32 %v599, %v601
    %603 = vadd.xlane.f32.xlu0 %v602
    %v604 = vpop.xlane.xlu0 %603
    %v605 = vadd.f32 %v590, %v604
    %vm606 = vcmask 7168
    %607 = vst.msk [vmem:[#allocation4] sm:$0xff] %vm606, %v605
    %608 = vst.msk [vmem:[#allocation3] sm:$0xff] %vm606, %v585
    // Predicated region
    $region58: #{tpu_custom_call.1} parent=1 // pred_check
      %p609 = pneg %p95
    $region59: #{tpu_custom_call.1} parent=1 // pred_check_branch
      %611 = sbr.rel (%p609) target = $region61
    $region60: #{tpu_custom_call.1} parent=1 // pred_region
      %v612 = vld [vmem:[#allocation14] sm:$0xff]
      %v613 = vld [vmem:[#allocation14 + $0x8] sm:$0xff]
      %v614 = vld [vmem:[#allocation3] sm:$0xff]
      %v615 = vld [vmem:[#allocation4] sm:$0xff]
      %v616 = vlog2.pop %v615
      %v617 = vmul.f32 %v616, 0.6931472
      %v618 = vadd.f32 %v614, %v617
      %620 = vset.pattern.permute.xlu0 0
      %621 = vperm.xlu0 %620, %v618
      %v622 = vpop.permute.xlu0 %621
      %v624 = vsub.f32 %v612, %v622
      %v625 = vsub.f32 %v613, %v622
      %626 = vst [vmem:[#allocation14] sm:$0xff] %v624
      %627 = vst [vmem:[#allocation14 + $0x8] sm:$0xff] %v625
    $region61: #{tpu_custom_call.1} parent=1 // pred_fallthru
      _
    // Predicated region
    $region62: #{tpu_custom_call.1} parent=1 // pred_check
      _
    $region63: #{tpu_custom_call.1} parent=1 // pred_check_branch
      %629 = sbr.rel (0) target = $region65
    $region64: #{tpu_custom_call.1} parent=1 // pred_region
      %s631 = ssub.s32 256, 256
      %632 = vsyncadd [#allocation7], %s631
      %s634 = sshll.u32 [#allocation14], 4
      %s635 = int_to_ptr.vmem [resolvable:$true] %s634
      %637 = dma.vmem_to_hbm [thread:$0]  %s635, 256, %s8, [#allocation7]
    $region65: #{tpu_custom_call.1} parent=1 // pred_fallthru
      _
    // Predicated region
    $region66: #{tpu_custom_call.1} parent=1 // pred_check
      _
    $region67: #{tpu_custom_call.1} parent=1 // pred_check_branch
      %639 = sbr.rel (0) target = $region69
    $region68: #{tpu_custom_call.1} parent=1 // pred_region
      %640 = dma.done [#allocation7], 256
    $region69: #{tpu_custom_call.1} parent=1 // pred_fallthru
      _
    %641 = vsyncpa [#allocation6], 1
    %642 = vsyncpa [#allocation9], 1
    %643 = vsyncpa [#allocation12], 1
    %644 = vsyncpa [#allocation7], 1

</llo_original>
